<compile_context>
chip_gen: v6e
topology: v6e:2x2x1
jax: 0.10.0
libtpu: 0.0.40
codegen_flags: <defaults>
</compile_context>

<pallas_src>
import jax
import jax.numpy as jnp
from jax.experimental import pallas as pl
from jax.experimental.pallas import tpu as pltpu


_SUBLANE = 8
_DEFAULT_SINGLE_BLOCK_MAX_BYTES = 4 * 1024 * 1024   # whole-sample path cap
_DEFAULT_TILE_TARGET_BYTES = 2 * 1024 * 1024        # per-tile target (streamed)
_VMEM_LIMIT_BYTES = 32 * 1024 * 1024                # safe on v5e / v6e / v7x


def _choose_dense_layout(C, HW):
    """(R, L) view of one flattened sample: L | HW (each row = one channel),
    R = C*HW/L a multiple of 8 for dense sublane packing."""
    for L in (512, 256, 128):
        if HW % L == 0:
            R = (C * HW) // L
            if R % _SUBLANE == 0:
                return R, L
    return None


def _choose_tile_rows(R, L, itemsize, target_bytes):
    """Largest multiple-of-8 divisor of R whose (TR, L) tile fits target."""
    for tr in range(R, _SUBLANE - 1, -_SUBLANE):
        if R % tr == 0 and tr * L * itemsize <= target_bytes:
            return tr
    return _SUBLANE


# ----------------------------------------------------------------------------
# Kernels
# ----------------------------------------------------------------------------
def _ln_whole_sample_kernel(eps, n_elems):
    dof = max(n_elems - 1, 1)  # guard degenerate C*H*W == 1

    def kernel(x_ref, g_ref, b_ref, o_ref):
        # x_ref: (1, rows, lanes) -- one whole sample.
        xf = x_ref[...].astype(jnp.float32)
        mean = jnp.sum(xf) / n_elems
        centered = xf - mean
        var = jnp.sum(centered * centered) / dof       # unbiased (ddof=1)
        inv = 1.0 / (jnp.sqrt(var) + eps)              # eps added to std
        scale = g_ref[...] * inv                       # (1, rows, 1)
        shift = b_ref[...] - mean * scale              # (1, rows, 1)
        o_ref[...] = (xf * scale + shift).astype(o_ref.dtype)

    return kernel


def _ln_stats_kernel(eps, n_tile, n_total):
    dof = max(n_total - 1, 1)
    n_tile_f = float(n_tile)

    def kernel(x_ref, mean_out, inv_out, mean_acc, m2_acc):
        t = pl.program_id(1)

        @pl.when(t == 0)
        def _():
            mean_acc[...] = jnp.zeros_like(mean_acc)
            m2_acc[...] = jnp.zeros_like(m2_acc)

        # Tile-local centered partial sums, f32 accumulation.
        xf = x_ref[...].astype(jnp.float32)            # (1, TR, L)
        tile_mean = jnp.sum(xf) / n_tile_f
        d = xf - tile_mean
        tile_m2 = jnp.sum(d * d)

        # Chan's parallel-variance combine (robust one-sweep reduction).
        n_prev = t.astype(jnp.float32) * n_tile_f
        n_new = n_prev + n_tile_f
        mean_prev = mean_acc[...]                      # (1, 1)
        delta = tile_mean - mean_prev
        mean_acc[...] = mean_prev + delta * (n_tile_f / n_new)
        m2_acc[...] = (m2_acc[...] + tile_m2
                       + delta * delta * (n_prev * n_tile_f / n_new))

        @pl.when(t == pl.num_programs(1) - 1)
        def _():
            var = m2_acc[...] / dof                    # unbiased (ddof=1)
            mean_out[...] = mean_acc[...].reshape(1, 1, 1)
            inv_out[...] = (1.0 / (jnp.sqrt(var) + eps)).reshape(1, 1, 1)

    return kernel


def _ln_apply_kernel(x_ref, g_ref, b_ref, mean_ref, inv_ref, o_ref):
    xf = x_ref[...].astype(jnp.float32)                # (1, TR, L)
    scale = g_ref[...] * inv_ref[...]                  # (1, TR, 1)
    shift = b_ref[...] - mean_ref[...] * scale         # (1, TR, 1)
    o_ref[...] = (xf * scale + shift).astype(o_ref.dtype)


# ----------------------------------------------------------------------------
# Wrapper
# ----------------------------------------------------------------------------
def layer_norm_pallas(x_nchw, gamma, beta, eps=1e-5, *,
                      single_block_max_bytes=_DEFAULT_SINGLE_BLOCK_MAX_BYTES,
                      tile_target_bytes=_DEFAULT_TILE_TARGET_BYTES):
    """x_nchw: (N, C, H, W); gamma, beta: (C,)."""
    N, C, H, W = x_nchw.shape
    HW = H * W
    n_total = C * HW
    itemsize = x_nchw.dtype.itemsize
    sample_bytes = n_total * itemsize

    layout = _choose_dense_layout(C, HW)
    if layout is not None:
        R, L = layout
        rows_per_chan = HW // L
        x3 = x_nchw.reshape(N, R, L)
        g_rows = jnp.repeat(gamma.astype(jnp.float32), rows_per_chan).reshape(1, R, 1)
        b_rows = jnp.repeat(beta.astype(jnp.float32), rows_per_chan).reshape(1, R, 1)
    else:
        # Fallback layout (C, HW): correct for any shape, just less dense.
        R, L = C, HW
        x3 = x_nchw.reshape(N, C, HW)
        g_rows = gamma.reshape(1, C, 1).astype(jnp.float32)
        b_rows = beta.reshape(1, C, 1).astype(jnp.float32)

    cost = pl.CostEstimate(
        flops=2 * N * n_total,
        transcendentals=N,
        bytes_accessed=2 * N * n_total * itemsize,
    )

    if layout is None or sample_bytes <= single_block_max_bytes:
        # Whole-sample path: 2x HBM traffic, one grid step per sample.
        # TODO(synk): very large samples with no lane-dense layout land here;
        # a masked/padded streamed variant is not implemented.
        vmem_limit = int(max(_VMEM_LIMIT_BYTES, 4 * sample_bytes + (4 << 20)))
        out = pl.pallas_call(
            _ln_whole_sample_kernel(eps, n_total),
            out_shape=jax.ShapeDtypeStruct((N, R, L), x_nchw.dtype),
            grid_spec=pltpu.PrefetchScalarGridSpec(
                num_scalar_prefetch=0,
                grid=(N,),
                in_specs=[
                    pl.BlockSpec((1, R, L), lambda n: (n, 0, 0)),
                    pl.BlockSpec((1, R, 1), lambda n: (0, 0, 0)),
                    pl.BlockSpec((1, R, 1), lambda n: (0, 0, 0)),
                ],
                out_specs=pl.BlockSpec((1, R, L), lambda n: (n, 0, 0)),
            ),
            compiler_params=pltpu.CompilerParams(
                dimension_semantics=("parallel",),
                vmem_limit_bytes=vmem_limit,
            ),
            input_output_aliases={0: 0},
            cost_estimate=cost,
        )(x3, g_rows, b_rows)
        return out.reshape(N, C, H, W)

    # Two-sweep streamed path for large samples.
    TR = _choose_tile_rows(R, L, itemsize, tile_target_bytes)
    T = R // TR
    n_tile = TR * L

    # Sweep 1: per-sample mean and 1/(std + eps).
    mean_s, inv_s = pl.pallas_call(
        _ln_stats_kernel(eps, n_tile, n_total),
        out_shape=(
            jax.ShapeDtypeStruct((N, 1, 1), jnp.float32),
            jax.ShapeDtypeStruct((N, 1, 1), jnp.float32),
        ),
        grid_spec=pltpu.PrefetchScalarGridSpec(
            num_scalar_prefetch=0,
            grid=(N, T),
            in_specs=[pl.BlockSpec((1, TR, L), lambda n, t: (n, t, 0))],
            out_specs=(
                pl.BlockSpec((1, 1, 1), lambda n, t: (n, 0, 0)),
                pl.BlockSpec((1, 1, 1), lambda n, t: (n, 0, 0)),
            ),
            scratch_shapes=[
                pltpu.VMEM((1, 1), jnp.float32),   # running mean
                pltpu.VMEM((1, 1), jnp.float32),   # running M2
            ],
        ),
        compiler_params=pltpu.CompilerParams(
            dimension_semantics=("parallel", "arbitrary"),
            vmem_limit_bytes=_VMEM_LIMIT_BYTES,
        ),
    )(x3)

    # Sweep 2: out = x * (gamma*inv) + (beta - mean*gamma*inv), tiled/streamed.
    out = pl.pallas_call(
        _ln_apply_kernel,
        out_shape=jax.ShapeDtypeStruct((N, R, L), x_nchw.dtype),
        grid_spec=pltpu.PrefetchScalarGridSpec(
            num_scalar_prefetch=0,
            grid=(N, T),
            in_specs=[
                pl.BlockSpec((1, TR, L), lambda n, t: (n, t, 0)),
                pl.BlockSpec((1, TR, 1), lambda n, t: (0, t, 0)),
                pl.BlockSpec((1, TR, 1), lambda n, t: (0, t, 0)),
                pl.BlockSpec((1, 1, 1), lambda n, t: (n, 0, 0)),
                pl.BlockSpec((1, 1, 1), lambda n, t: (n, 0, 0)),
            ],
            out_specs=pl.BlockSpec((1, TR, L), lambda n, t: (n, t, 0)),
        ),
        compiler_params=pltpu.CompilerParams(
            dimension_semantics=("parallel", "parallel"),
            vmem_limit_bytes=_VMEM_LIMIT_BYTES,
        ),
        input_output_aliases={0: 0},
        cost_estimate=cost,
    )(x3, g_rows, b_rows, mean_s, inv_s)
    return out.reshape(N, C, H, W)


# ----------------------------------------------------------------------------
# Pure-JAX reference mirroring the PyTorch forward
# ----------------------------------------------------------------------------
def layer_norm_ref(x_nchw, gamma, beta, eps=1e-5):
    N = x_nchw.shape[0]
    flat = x_nchw.reshape(N, -1)
    mean = flat.mean(axis=1).reshape(N, 1, 1, 1)
    std = jnp.sqrt(
        jnp.sum((flat - flat.mean(axis=1, keepdims=True)) ** 2, axis=1)
        / (flat.shape[1] - 1)
    ).reshape(N, 1, 1, 1)
    y = (x_nchw - mean) / (std + eps)
    C = gamma.shape[0]
    return y * gamma.reshape(1, C, 1, 1) + beta.reshape(1, C, 1, 1)


if __name__ == "__main__":
    key = jax.random.PRNGKey(0)
    kx, kg, kx2, kg2, kb2 = jax.random.split(key, 5)

    # Test 1: module-implied small shape -> whole-sample lane-dense path.
    N, C, H, W = 2, 4, 16, 16
    x = jax.random.normal(kx, (N, C, H, W), dtype=jnp.float32)
    gamma = jax.random.uniform(kg, (C,), dtype=jnp.float32)  # torch uniform_()
    beta = jnp.zeros((C,), dtype=jnp.float32)                # torch zeros

    out = layer_norm_pallas(x, gamma, beta, eps=1e-5)
    out = jax.block_until_ready(out)
    ref = layer_norm_ref(x, gamma, beta, eps=1e-5)
    assert out.shape == (N, C, H, W)
    assert jnp.allclose(out, ref, atol=1e-5, rtol=1e-5), "mismatch (small path)"

    # Test 2: force the two-sweep streamed path (still a small shape).
    N2, C2, H2, W2 = 2, 8, 32, 64
    x2 = jax.random.normal(kx2, (N2, C2, H2, W2), dtype=jnp.float32)
    gamma2 = jax.random.uniform(kg2, (C2,), dtype=jnp.float32)
    beta2 = 0.1 * jax.random.normal(kb2, (C2,), dtype=jnp.float32)
    out2 = layer_norm_pallas(x2, gamma2, beta2, eps=1e-5,
                             single_block_max_bytes=0,
                             tile_target_bytes=16 * 1024)
    out2 = jax.block_until_ready(out2)
    ref2 = layer_norm_ref(x2, gamma2, beta2, eps=1e-5)
    assert out2.shape == (N2, C2, H2, W2)
    assert jnp.allclose(out2, ref2, atol=1e-4, rtol=1e-4), "mismatch (tiled path)"

    print("KERNEL_OK")
</pallas_src>

<mosaic_0001>
module attributes {stable_mosaic.version = 11 : i64} {
  func.func @kernel(%arg0: i32, %arg1: memref<1x8x128xf32, #tpu.memory_space<vmem>>, %arg2: memref<1x8x1xf32, #tpu.memory_space<vmem>>, %arg3: memref<1x8x1xf32, #tpu.memory_space<vmem>>, %arg4: memref<1x8x128xf32, #tpu.memory_space<vmem>>) attributes {dimension_semantics = [#tpu.dimension_semantics<parallel>], iteration_bounds = array<i64: 2>, scalar_prefetch = 0 : i64, scratch_operands = 0 : i64, tpu.core_type = #tpu.core_type<tc>, window_params = [{transform_indices = @transform_0, window_bounds = array<i64: 1, 8, 128>}, {pipeline_mode = #tpu.pipeline_mode<synchronous>, transform_indices = @transform_1, window_bounds = array<i64: 1, 8, 1>}, {pipeline_mode = #tpu.pipeline_mode<synchronous>, transform_indices = @transform_2, window_bounds = array<i64: 1, 8, 1>}, {transform_indices = @transform_3, window_bounds = array<i64: 1, 8, 128>}]} {
    %c0 = arith.constant 0 : index
    %c0_0 = arith.constant 0 : index
    %c0_1 = arith.constant 0 : index
    %0 = vector.load %arg1[%c0, %c0_0, %c0_1] : memref<1x8x128xf32, #tpu.memory_space<vmem>>, vector<1x8x128xf32>
    %1 = vector.shape_cast %0 : vector<1x8x128xf32> to vector<1x1x8x128xf32>
    %cst = arith.constant dense<0.000000e+00> : vector<1xf32>
    %2 = vector.multi_reduction <add>, %1, %cst [1, 2, 3] : vector<1x1x8x128xf32> to vector<1xf32>
    %3 = vector.shape_cast %2 : vector<1xf32> to vector<1x1x1x1xf32>
    %4 = vector.extract %3[0, 0, 0, 0] : f32 from vector<1x1x1x1xf32>
    %cst_2 = arith.constant 1.024000e+03 : f32
    %5 = arith.divf %4, %cst_2 : f32
    %6 = vector.broadcast %5 : f32 to vector<1x8x128xf32>
    %7 = arith.subf %0, %6 : vector<1x8x128xf32>
    %8 = arith.mulf %7, %7 : vector<1x8x128xf32>
    %9 = vector.shape_cast %8 : vector<1x8x128xf32> to vector<1x1x8x128xf32>
    %cst_3 = arith.constant dense<0.000000e+00> : vector<1xf32>
    %10 = vector.multi_reduction <add>, %9, %cst_3 [1, 2, 3] : vector<1x1x8x128xf32> to vector<1xf32>
    %11 = vector.shape_cast %10 : vector<1xf32> to vector<1x1x1x1xf32>
    %12 = vector.extract %11[0, 0, 0, 0] : f32 from vector<1x1x1x1xf32>
    %cst_4 = arith.constant 1.023000e+03 : f32
    %13 = arith.divf %12, %cst_4 : f32
    %14 = math.sqrt %13 : f32
    %cst_5 = arith.constant 9.99999974E-6 : f32
    %15 = arith.addf %14, %cst_5 : f32
    %cst_6 = arith.constant 1.000000e+00 : f32
    %16 = arith.divf %cst_6, %15 : f32
    %c0_7 = arith.constant 0 : index
    %c0_8 = arith.constant 0 : index
    %c0_9 = arith.constant 0 : index
    %17 = vector.load %arg2[%c0_7, %c0_8, %c0_9] : memref<1x8x1xf32, #tpu.memory_space<vmem>>, vector<1x8x1xf32>
    %18 = vector.broadcast %16 : f32 to vector<1x8x1xf32>
    %19 = arith.mulf %17, %18 : vector<1x8x1xf32>
    %c0_10 = arith.constant 0 : index
    %c0_11 = arith.constant 0 : index
    %c0_12 = arith.constant 0 : index
    %20 = vector.load %arg3[%c0_10, %c0_11, %c0_12] : memref<1x8x1xf32, #tpu.memory_space<vmem>>, vector<1x8x1xf32>
    %21 = vector.broadcast %5 : f32 to vector<1x8x1xf32>
    %22 = arith.mulf %21, %19 : vector<1x8x1xf32>
    %23 = arith.subf %20, %22 : vector<1x8x1xf32>
    %24 = vector.broadcast %19 : vector<1x8x1xf32> to vector<1x8x128xf32>
    %25 = arith.mulf %0, %24 : vector<1x8x128xf32>
    %26 = vector.broadcast %23 : vector<1x8x1xf32> to vector<1x8x128xf32>
    %27 = arith.addf %25, %26 : vector<1x8x128xf32>
    %c0_13 = arith.constant 0 : index
    %c0_14 = arith.constant 0 : index
    %c0_15 = arith.constant 0 : index
    %28 = vector.load %arg4[%c0_13, %c0_14, %c0_15] : memref<1x8x128xf32, #tpu.memory_space<vmem>>, vector<1x8x128xf32>
    tpu.vector_store %arg4[%c0_13, %c0_14, %c0_15], %27 {strides = array<i32>} : memref<1x8x128xf32, #tpu.memory_space<vmem>>, vector<1x8x128xf32>,
    return
  }
  func.func @transform_0(%arg0: i32) -> (i32, i32, i32) {
    %c0_i32 = arith.constant 0 : i32
    %c0_i32_0 = arith.constant 0 : i32
    %c0_i32_1 = arith.constant 0 : i32
    return %arg0, %c0_i32, %c0_i32_0 : i32, i32, i32
  }
  func.func @transform_1(%arg0: i32) -> (i32, i32, i32) {
    %c0_i32 = arith.constant 0 : i32
    %c0_i32_0 = arith.constant 0 : i32
    %c0_i32_1 = arith.constant 0 : i32
    %c0_i32_2 = arith.constant 0 : i32
    return %c0_i32, %c0_i32_0, %c0_i32_1 : i32, i32, i32
  }
  func.func @transform_2(%arg0: i32) -> (i32, i32, i32) {
    %c0_i32 = arith.constant 0 : i32
    %c0_i32_0 = arith.constant 0 : i32
    %c0_i32_1 = arith.constant 0 : i32
    %c0_i32_2 = arith.constant 0 : i32
    return %c0_i32, %c0_i32_0, %c0_i32_1 : i32, i32, i32
  }
  func.func @transform_3(%arg0: i32) -> (i32, i32, i32) {
    %c0_i32 = arith.constant 0 : i32
    %c0_i32_0 = arith.constant 0 : i32
    %c0_i32_1 = arith.constant 0 : i32
    return %arg0, %c0_i32, %c0_i32_0 : i32, i32, i32
  }
}

</mosaic_0001>

<llo_original>
// kernel: tpu_custom_call.1
$region0: #{tpu_custom_call.1}
  #allocation0 [shape = 'u32[]', space=smem, size = 0x4, offset = 0x4, fixed_abs, tag = 'smem constant byte address 0x4 - core index']
  #allocation1 [shape = 'u32[144,128]{1,0:T(1,128)}', space=vmem, size = 0x12000, scoped, tag = 'internal scratch']
  %s0 = inlined_call_operand.hbm [shape: f32[2,8,128], index: 0, kind: input, shape index: {}, may-alias: {0,3}]
  %s1 = inlined_call_operand.vmem [shape: f32[1,8,1], index: 1, kind: input, shape index: {}]
  %s2 = inlined_call_operand.vmem [shape: f32[1,8,1], index: 2, kind: input, shape index: {}]
  %s3 = inlined_call_operand.hbm [shape: f32[2,8,128], index: 3, kind: output, shape index: {}, may-alias: {0,3}]
  %s4 = sld [smem:[#allocation0]]
  $region49: #{tpu_custom_call.1} parent=0
    _
  %s6 = ssub.s32 1, %s4
  %s7 = scalar_select 0, %s6, %s4
  $region1: #{tpu_custom_call.1} parent=0
    #allocation2 [shape = 'u8[8192]{0}', space=vmem, size = 0x2000, scoped, tag = 'input window, operand 0']
    #allocation3 [shape = 's32[2]{0}', space=sflag, size = 0x8, scoped, tag = 'scoped memory for tpu_custom_call.1']
    #allocation4 [shape = 's32[2]{0}', space=sflag, size = 0x8, scoped, tag = 'scoped memory for tpu_custom_call.1']
    #allocation5 [shape = 'u8[8192]{0}', space=vmem, size = 0x2000, scoped, tag = 'output window, operand 0']
    %8 = vsyncpa [#allocation3], 0
    %s9 = scalar_lea.sflag [#allocation3], 1
    %10 = vsyncpa %s9, 0
    %11 = vsyncpa [#allocation4], 0
    %s12 = scalar_lea.sflag [#allocation4], 1
    %13 = vsyncpa %s12, 0
    loop: start=0, step=1, limit=4
    $region2: #{tpu_custom_call.1} parent=1 // loop_pre_header
      _
    $region3: #{tpu_custom_call.1} parent=1 // loop_header
      %s15 = sphi 0, %s19
      %p16 = scmp.ge.s32.totalorder %s15, 4
      %s25 = sphi 0, %s27
      %s28 = sphi 0, %s25
      %s29 = sphi 0, %s28
      %s45 = sphi 0, %s29
      %s49 = sphi 0, %s49
      %s51 = sphi 0, %s49
      %s52 = sphi 0, %s51
      %s66 = sphi 0, %s52
      %s70 = sphi 0, %s70
      %s72 = sphi 0, %s70
      %s73 = sphi 0, %s72
      %s87 = sphi 0, %s73
      %s93 = sphi 0, %s95
      %s96 = sphi 0, %s93
      %s97 = sphi 0, %s96
      %s113 = sphi 0, %s97
    $region4: #{tpu_custom_call.1} parent=1 // loop_header_branch
      %18 = sbr.rel (%p16) target = $region8
    $region5: #{tpu_custom_call.1} parent=1 // loop_body
      %s20 = ssub.s32 %s15, 1
      %s21 = ssub.s32 %s15, 2
      %s22 = sadd.s32 %s15, 1
      %s23 = ssub.s32 %s15, %s22
      %p24 = scmp.eq.s32.totalorder %s23, 0
      %s26 = sadd.s32 %s25, 1
      %s27 = scalar_select %p24, %s25, %s26
      %p30 = pneg %p24
      %p31 = scmp.eq.s32.totalorder %s15, 1
      %p32 = por %p30, %p31
      %p33 = scmp.ne.s32.totalorder %s25, %s28
      %p34 = scmp.eq.s32.totalorder %s15, 0
      %p35 = por %p33, %p34
      %p36 = scmp.ne.s32.totalorder %s25, %s28
      %p37 = scmp.eq.s32.totalorder %s20, 1
      %p38 = por %p36, %p37
      %p39 = scmp.ne.s32.totalorder %s28, %s29
      %p40 = scmp.eq.s32.totalorder %s20, 0
      %p41 = por %p39, %p40
      %p42 = scmp.ne.s32.totalorder %s28, %s29
      %p43 = scmp.eq.s32.totalorder %s21, 1
      %p44 = por %p42, %p43
      %p46 = scmp.ne.s32.totalorder %s29, %s45
      %p47 = scmp.eq.s32.totalorder %s21, 0
      %p48 = por %p46, %p47
      %s50 = sadd.s32 %s49, 1
      %p53 = scmp.eq.s32.totalorder %s15, 1
      %p54 = scmp.ne.s32.totalorder %s49, %s51
      %p55 = scmp.eq.s32.totalorder %s15, 0
      %p56 = por %p54, %p55
      %p57 = scmp.ne.s32.totalorder %s49, %s51
      %p58 = scmp.eq.s32.totalorder %s20, 1
      %p59 = por %p57, %p58
      %p60 = scmp.ne.s32.totalorder %s51, %s52
      %p61 = scmp.eq.s32.totalorder %s20, 0
      %p62 = por %p60, %p61
      %p63 = scmp.ne.s32.totalorder %s51, %s52
      %p64 = scmp.eq.s32.totalorder %s21, 1
      %p65 = por %p63, %p64
      %p67 = scmp.ne.s32.totalorder %s52, %s66
      %p68 = scmp.eq.s32.totalorder %s21, 0
      %p69 = por %p67, %p68
      %s71 = sadd.s32 %s70, 1
      %p74 = scmp.eq.s32.totalorder %s15, 1
      %p75 = scmp.ne.s32.totalorder %s70, %s72
      %p76 = scmp.eq.s32.totalorder %s15, 0
      %p77 = por %p75, %p76
      %p78 = scmp.ne.s32.totalorder %s70, %s72
      %p79 = scmp.eq.s32.totalorder %s20, 1
      %p80 = por %p78, %p79
      %p81 = scmp.ne.s32.totalorder %s72, %s73
      %p82 = scmp.eq.s32.totalorder %s20, 0
      %p83 = por %p81, %p82
      %p84 = scmp.ne.s32.totalorder %s72, %s73
      %p85 = scmp.eq.s32.totalorder %s21, 1
      %p86 = por %p84, %p85
      %p88 = scmp.ne.s32.totalorder %s73, %s87
      %p89 = scmp.eq.s32.totalorder %s21, 0
      %p90 = por %p88, %p89
      %s91 = ssub.s32 %s15, %s22
      %p92 = scmp.eq.s32.totalorder %s91, 0
      %s94 = sadd.s32 %s93, 1
      %s95 = scalar_select %p92, %s93, %s94
      %p98 = pneg %p92
      %p99 = scmp.eq.s32.totalorder %s15, 1
      %p100 = por %p98, %p99
      %p101 = scmp.ne.s32.totalorder %s93, %s96
      %p102 = scmp.eq.s32.totalorder %s15, 0
      %p103 = por %p101, %p102
      %p104 = scmp.ne.s32.totalorder %s93, %s96
      %p105 = scmp.eq.s32.totalorder %s20, 1
      %p106 = por %p104, %p105
      %p107 = scmp.ne.s32.totalorder %s96, %s97
      %p108 = scmp.eq.s32.totalorder %s20, 0
      %p109 = por %p107, %p108
      %p110 = scmp.ne.s32.totalorder %s96, %s97
      %p111 = scmp.eq.s32.totalorder %s21, 1
      %p112 = por %p110, %p111
      %p114 = scmp.ne.s32.totalorder %s97, %s113
      %p115 = scmp.eq.s32.totalorder %s21, 0
      %p116 = por %p114, %p115
      %p117 = scmp.le.s32.totalorder 1, %s15
      %p118 = scmp.lt.s32.totalorder %s15, 3
      %p119 = pnand %p117, %p118
      %p120 = pneg %p119
      // Predicated region
      $region9: #{tpu_custom_call.1} parent=5 // pred_check
        _
      $region10: #{tpu_custom_call.1} parent=5 // pred_check_branch
        %122 = sbr.rel (%p119) target = $region12
      $region11: #{tpu_custom_call.1} parent=5 // pred_region
        %s123 = ssub.s32 %s15, 1
        // Predicated region
        $region13: #{tpu_custom_call.1} parent=11 // pred_check
          %p124 = pneg %p62
        $region14: #{tpu_custom_call.1} parent=11 // pred_check_branch
          %126 = sbr.rel (%p124) target = $region16
        $region15: #{tpu_custom_call.1} parent=11 // pred_region
          _
        $region16: #{tpu_custom_call.1} parent=11 // pred_fallthru
          _
        // Predicated region
        $region17: #{tpu_custom_call.1} parent=11 // pred_check
          %p127 = pneg %p83
        $region18: #{tpu_custom_call.1} parent=11 // pred_check_branch
          %129 = sbr.rel (%p127) target = $region20
        $region19: #{tpu_custom_call.1} parent=11 // pred_region
          _
        $region20: #{tpu_custom_call.1} parent=11 // pred_fallthru
          _
      $region12: #{tpu_custom_call.1} parent=5 // pred_fallthru
        _
      %p130 = scmp.lt.s32.totalorder %s15, 2
      // Predicated region
      $region21: #{tpu_custom_call.1} parent=5 // pred_check
        %p131 = pneg %p130
      $region22: #{tpu_custom_call.1} parent=5 // pred_check_branch
        %133 = sbr.rel (%p131) target = $region24
      $region23: #{tpu_custom_call.1} parent=5 // pred_region
        // Predicated region
        $region25: #{tpu_custom_call.1} parent=23 // pred_check
          %p134 = pneg %p35
        $region26: #{tpu_custom_call.1} parent=23 // pred_check_branch
          %136 = sbr.rel (%p134) target = $region28
        $region27: #{tpu_custom_call.1} parent=23 // pred_region
          %s137 = sand.u32 %s25, 1
          %s138 = scalar_lea.sflag [#allocation3], %s137
          %s139 = sand.u32 %s25, 1
          %s140 = smul.addr %s139, 8
          %s141 = scalar_lea.vmem [#allocation2], %s140
          %s143 = ssub.s32 128, 128
          %144 = vsyncadd %s138, %s143
          %s145 = smul.addr %s15, 128
          %s146 = scalar_lea.hbm %s0, %s145
          %s148 = sshll.u32 %s141, 4
          %s149 = int_to_ptr.vmem [resolvable:$true] %s148
          %151 = dma.hbm_to_vmem [thread:$0]  %s146, 128, %s149, %s138
        $region28: #{tpu_custom_call.1} parent=23 // pred_fallthru
          _
      $region24: #{tpu_custom_call.1} parent=5 // pred_fallthru
        _
      %p152 = scmp.le.s32.totalorder 1, %s15
      %p153 = scmp.lt.s32.totalorder %s15, 3
      %p154 = pnand %p152, %p153
      %p155 = pneg %p154
      // Predicated region
      $region29: #{tpu_custom_call.1} parent=5 // pred_check
        _
      $region30: #{tpu_custom_call.1} parent=5 // pred_check_branch
        %157 = sbr.rel (%p154) target = $region32
      $region31: #{tpu_custom_call.1} parent=5 // pred_region
        %s158 = ssub.s32 %s15, 1
        %s159 = sand.u32 %s28, 1
        %s160 = scalar_lea.sflag [#allocation3], %s159
        %s161 = sand.u32 %s28, 1
        %s162 = smul.addr %s161, 8
        %s163 = scalar_lea.vmem [#allocation2], %s162
        // Predicated region
        $region33: #{tpu_custom_call.1} parent=31 // pred_check
          %p164 = pneg %p41
        $region34: #{tpu_custom_call.1} parent=31 // pred_check_branch
          %166 = sbr.rel (%p164) target = $region36
        $region35: #{tpu_custom_call.1} parent=31 // pred_region
          %167 = dma.done %s160, 128
        $region36: #{tpu_custom_call.1} parent=31 // pred_fallthru
          _
        %s168 = sand.u32 %s28, 1
        %s169 = scalar_lea.sflag [#allocation3], %s168
        %s170 = sand.u32 %s28, 1
        %s171 = smul.addr %s170, 8
        %s172 = scalar_lea.vmem [#allocation2], %s171
        %p173 = pneg %p41
        %p174 = pneg %p38
        %p175 = pneg %p62
        %p176 = pneg %p59
        %p177 = pneg %p83
        %p178 = pneg %p80
        %p179 = pneg %p109
        %p180 = pneg %p106
        %s181 = sand.u32 %s96, 1
        %s182 = scalar_lea.sflag [#allocation4], %s181
        %s183 = sand.u32 %s96, 1
        %s184 = smul.addr %s183, 8
        %s185 = scalar_lea.vmem [#allocation5], %s184
        %v186 = vld [vmem:[%s163] sm:$0xff]
        %187 = vadd.xlane.f32.xlu0 %v186
        %v188 = vpop.xlane.xlu0 %187
        %v189 = vrot.slane %v188, 4
        %v190 = vadd.f32 %v188, %v189
        %v191 = vrot.slane %v190, 2
        %v192 = vadd.f32 %v190, %v191
        %v193 = vrot.slane %v192, 1
        %v194 = vadd.f32 %v192, %v193
        %s195 = vtos %v194
        %v196 = vrcp.pop 1024.0
        %s197 = vtos %v196
        %s198 = smul.f32 %s195, %s197
        %v199 = vstv %s198
        %v200 = vsub.f32 %v186, %v199
        %v201 = vmul.f32 %v200, %v200
        %202 = vadd.xlane.f32.xlu0 %v201
        %v203 = vpop.xlane.xlu0 %202
        %v204 = vrot.slane %v203, 4
        %v205 = vadd.f32 %v203, %v204
        %v206 = vrot.slane %v205, 2
        %v207 = vadd.f32 %v205, %v206
        %v208 = vrot.slane %v207, 1
        %v209 = vadd.f32 %v207, %v208
        %s210 = vtos %v209
        %v211 = vrcp.pop 1023.0
        %s212 = vtos %v211
        %s213 = smul.f32 %s210, %s212
        %v214 = vstv %s213
        %v215 = vrsqrt.pop %v214
        %v216 = vmul.f32 %v214, %v215
        %vm217 = vcmp.eq.f32.partialorder %v214, inf
        %v218 = vsel %vm217, %v214, %v216
        %vm219 = vcmp.eq.f32.partialorder %v214, 0.0
        %v220 = vand.u32 %v214, 2147483648
        %v221 = vsel %vm219, %v220, %v218
        %s222 = vtos %v221
        %s223 = sadd.f32 %s222, 1e-05
        %v224 = vstv %s223
        %v225 = vrcp.pop %v224
        %s226 = vtos %v225
        %v227 = vld [vmem:[%s1] sm:$0xff]
        %v228 = vstv %s226
        %v229 = vmul.f32 %v227, %v228
        %v230 = vld [vmem:[%s2] sm:$0xff]
        %v231 = vmul.f32 %v199, %v229
        %v232 = vsub.f32 %v230, %v231
        %234 = vset.pattern.permute.xlu0 0
        %235 = vperm.xlu0 %234, %v229
        %v236 = vpop.permute.xlu0 %235
        %v238 = vmul.f32 %v186, %v236
        %240 = vset.pattern.permute.xlu0 0
        %241 = vperm.xlu0 %240, %v232
        %v242 = vpop.permute.xlu0 %241
        %v244 = vadd.f32 %v238, %v242
        %245 = vst [vmem:[%s185] sm:$0xff] %v244
        %s246 = sand.u32 %s96, 1
        %s247 = scalar_lea.sflag [#allocation4], %s246
        %s248 = sand.u32 %s96, 1
        %s249 = smul.addr %s248, 8
        %s250 = scalar_lea.vmem [#allocation5], %s249
        // Predicated region
        $region37: #{tpu_custom_call.1} parent=31 // pred_check
          %p251 = pneg %p106
        $region38: #{tpu_custom_call.1} parent=31 // pred_check_branch
          %253 = sbr.rel (%p251) target = $region40
        $region39: #{tpu_custom_call.1} parent=31 // pred_region
          %s255 = ssub.s32 128, 128
          %256 = vsyncadd %s247, %s255
          %s257 = smul.addr %s20, 128
          %s258 = scalar_lea.hbm %s3, %s257
          %s260 = sshll.u32 %s250, 4
          %s261 = int_to_ptr.vmem [resolvable:$true] %s260
          %263 = dma.vmem_to_hbm [thread:$0]  %s261, 128, %s258, %s247
        $region40: #{tpu_custom_call.1} parent=31 // pred_fallthru
          _
      $region32: #{tpu_custom_call.1} parent=5 // pred_fallthru
        _
      %p264 = scmp.le.s32.totalorder 2, %s15
      // Predicated region
      $region41: #{tpu_custom_call.1} parent=5 // pred_check
        %p265 = pneg %p264
      $region42: #{tpu_custom_call.1} parent=5 // pred_check_branch
        %267 = sbr.rel (%p265) target = $region44
      $region43: #{tpu_custom_call.1} parent=5 // pred_region
        %s268 = ssub.s32 %s15, 2
        // Predicated region
        $region45: #{tpu_custom_call.1} parent=43 // pred_check
          %p269 = pneg %p112
        $region46: #{tpu_custom_call.1} parent=43 // pred_check_branch
          %271 = sbr.rel (%p269) target = $region48
        $region47: #{tpu_custom_call.1} parent=43 // pred_region
          %s272 = sand.u32 %s97, 1
          %s273 = scalar_lea.sflag [#allocation4], %s272
          %s274 = sand.u32 %s97, 1
          %s275 = smul.addr %s274, 8
          %s276 = scalar_lea.vmem [#allocation5], %s275
          %277 = dma.done %s273, 128
        $region48: #{tpu_custom_call.1} parent=43 // pred_fallthru
          _
      $region44: #{tpu_custom_call.1} parent=5 // pred_fallthru
        _
    $region6: #{tpu_custom_call.1} parent=1 // loop_footer
      %s19 = sadd.s32 1, %s15
    $region7: #{tpu_custom_call.1} parent=1 // loop_footer_branch
      %14 = sbr.rel target = $region3
    $region8: #{tpu_custom_call.1} parent=1 // loop_exit
      _
    %278 = vsyncpa [#allocation3], 1
    %s279 = scalar_lea.sflag [#allocation3], 1
    %280 = vsyncpa %s279, 1
    %281 = vsyncpa [#allocation4], 1
    %s282 = scalar_lea.sflag [#allocation4], 1
    %283 = vsyncpa %s282, 1

</llo_original>
